<compile_context>
chip_gen: v7x
topology: tpu7x:2x2x1
jax: 0.10.0
libtpu: 0.0.40
codegen_flags: <defaults>
</compile_context>

<pallas_src>
import jax
import jax.numpy as jnp
from jax.experimental import pallas as pl
from jax.experimental.pallas import tpu as pltpu

LANES = 128  # vreg lane width; last block dim must be a multiple of this.


def _linear_kernel(wb_ref, x_ref, o_ref):
    # wb_ref: SMEM (2,) f32  -> [weight, bias]
    # x_ref / o_ref: VMEM (tile_rows, 128) tiles in the input dtype.
    w = wb_ref[0]
    b = wb_ref[1]
    o_ref[...] = (x_ref[...].astype(jnp.float32) * w + b).astype(o_ref.dtype)


def _sublane_multiple(dtype) -> int:
    # Sub-32-bit dtypes pack along sublanes: bf16 vreg = 16x128, int8 = 32x128.
    itemsize = jnp.dtype(dtype).itemsize
    return {4: 8, 2: 16, 1: 32}.get(itemsize, 8)


def linear_1x1(x: jax.Array, weight: jax.Array, bias: jax.Array,
               *, tile_rows: int = 4096, force_pallas: bool = False) -> jax.Array:
    """y = x @ weight.T + bias for weight (1,1), bias (1,), x (N, 1).

    Internally runs lane-dense (rows, 128) tiles through a pipelined Pallas
    kernel; the result is reshaped back to (N, 1) in the caller's dtype.
    """
    n = x.shape[0]
    dtype = x.dtype
    itemsize = jnp.dtype(dtype).itemsize

    w32 = weight.reshape(()).astype(jnp.float32)
    b32 = bias.reshape(()).astype(jnp.float32)

    # Dtype-aware tile geometry.
    sub = _sublane_multiple(dtype)
    rows = pl.cdiv(n, LANES)
    rows_rounded = ((rows + sub - 1) // sub) * sub
    tr = min(tile_rows, rows_rounded)
    tr = ((tr + sub - 1) // sub) * sub          # multiple of the sublane pack
    padded_rows = pl.cdiv(rows, tr) * tr
    padded_n = padded_rows * LANES

    # Small-input gate: below one tile the launch / pad / relayout overhead
    # dominates; a fused XLA elementwise op is strictly faster.
    if not force_pallas and n < tr * LANES:
        return (x.astype(jnp.float32) * w32 + b32).astype(dtype).reshape((n, 1))

    # Fold weight & bias into a single SMEM scalar operand.
    wb = jnp.stack([w32, b32])

    # Lane-dense 2D slab: rows of 128 lanes, row-tiled grid.  Only pad when
    # N does not already fill whole tiles (avoids a full extra HBM pass).
    x_flat = x.reshape((n,))
    needs_pad = padded_n != n
    if needs_pad:
        x_flat = jnp.pad(x_flat, (0, padded_n - n))
    x2d = x_flat.reshape((padded_rows, LANES))

    y2d = pl.pallas_call(
        _linear_kernel,
        out_shape=jax.ShapeDtypeStruct((padded_rows, LANES), dtype),
        grid=(padded_rows // tr,),
        in_specs=[
            pl.BlockSpec(memory_space=pltpu.SMEM),        # [weight, bias]
            pl.BlockSpec((tr, LANES), lambda i: (i, 0)),  # x row tile
        ],
        out_specs=pl.BlockSpec((tr, LANES), lambda i: (i, 0)),
        compiler_params=pltpu.CompilerParams(
            dimension_semantics=("parallel",),
            vmem_limit_bytes=32 * 1024 * 1024,
        ),
        cost_estimate=pl.CostEstimate(
            flops=2 * padded_n,
            transcendentals=0,
            bytes_accessed=2 * padded_n * itemsize),
    )(wb, x2d)

    # Restore (N, 1); slice the padded tail only when padding actually happened.
    if needs_pad:
        return y2d.reshape((padded_n,))[:n].reshape((n, 1))
    return y2d.reshape((n, 1))


if __name__ == "__main__":
    key = jax.random.PRNGKey(0)
    kx, kw, kb, kx2, kx3, kx4 = jax.random.split(key, 6)

    # Deterministic parameters (PyTorch Linear(1,1) default init is U(-1, 1)).
    weight = jax.random.uniform(kw, (1, 1), dtype=jnp.float32,
                                minval=-1.0, maxval=1.0)
    bias = jax.random.uniform(kb, (1,), dtype=jnp.float32,
                              minval=-1.0, maxval=1.0)

    # 1) Small batch, Pallas path forced (padded-tail path exercised).
    N = 8
    x = jax.random.normal(kx, (N, 1), dtype=jnp.float32)
    y = jax.block_until_ready(linear_1x1(x, weight, bias,
                                         tile_rows=8, force_pallas=True))
    y_ref = x @ weight.T + bias
    assert y.shape == (N, 1) and y.dtype == x.dtype
    assert jnp.allclose(y, y_ref, atol=1e-6), (y, y_ref)

    # 2) Unaligned size, padded-tail path.
    N2 = 300
    x2 = jax.random.normal(kx2, (N2, 1), dtype=jnp.float32)
    y2 = jax.block_until_ready(linear_1x1(x2, weight, bias,
                                          tile_rows=8, force_pallas=True))
    y2_ref = x2 @ weight.T + bias
    assert y2.shape == (N2, 1)
    assert jnp.allclose(y2, y2_ref, atol=1e-6)

    # 3) Tile-aligned size: no pad, no tail slice.
    N3 = 1024  # = 8 rows * 128 lanes with tile_rows=8
    x3 = jax.random.normal(kx3, (N3, 1), dtype=jnp.float32)
    y3 = jax.block_until_ready(linear_1x1(x3, weight, bias,
                                          tile_rows=8, force_pallas=True))
    y3_ref = x3 @ weight.T + bias
    assert y3.shape == (N3, 1)
    assert jnp.allclose(y3, y3_ref, atol=1e-6)

    # 4) bf16 input: dtype-aware sublane rounding (tiles of 16 rows), aligned.
    N4 = 2048  # = 16 rows * 128 lanes
    x4 = jax.random.normal(kx4, (N4, 1), dtype=jnp.float32).astype(jnp.bfloat16)
    y4 = jax.block_until_ready(linear_1x1(x4, weight, bias,
                                          tile_rows=16, force_pallas=True))
    y4_ref = (x4.astype(jnp.float32) @ weight.T + bias).astype(jnp.bfloat16)
    assert y4.shape == (N4, 1) and y4.dtype == jnp.bfloat16
    assert jnp.allclose(y4.astype(jnp.float32), y4_ref.astype(jnp.float32),
                        atol=1e-2)

    # 5) Default call on a tiny input takes the fused-XLA fallback path.
    y5 = jax.block_until_ready(linear_1x1(x, weight, bias))
    assert jnp.allclose(y5, y_ref, atol=1e-6)

    print("KERNEL_OK")
</pallas_src>

<mosaic_0001>
module attributes {stable_mosaic.version = 11 : i64} {
  func.func @_linear_kernel(%arg0: i32, %arg1: memref<2xf32, #tpu.memory_space<smem>>, %arg2: memref<8x128xf32, #tpu.memory_space<vmem>>, %arg3: memref<8x128xf32, #tpu.memory_space<vmem>>) attributes {dimension_semantics = [#tpu.dimension_semantics<parallel>], iteration_bounds = array<i64: 1>, scalar_prefetch = 0 : i64, scratch_operands = 0 : i64, tpu.core_type = #tpu.core_type<tc>, window_params = [{transform_indices = @transform_0, window_bounds = array<i64: 2>}, {transform_indices = @transform_1, window_bounds = array<i64: 8, 128>}, {transform_indices = @transform_2, window_bounds = array<i64: 8, 128>}]} {
    %c0 = arith.constant 0 : index
    %0 = memref.load %arg1[%c0] : memref<2xf32, #tpu.memory_space<smem>>
    %c1 = arith.constant 1 : index
    %1 = memref.load %arg1[%c1] : memref<2xf32, #tpu.memory_space<smem>>
    %c0_0 = arith.constant 0 : index
    %c0_1 = arith.constant 0 : index
    %2 = vector.load %arg2[%c0_0, %c0_1] : memref<8x128xf32, #tpu.memory_space<vmem>>, vector<8x128xf32>
    %3 = vector.broadcast %0 : f32 to vector<8x128xf32>
    %4 = arith.mulf %2, %3 : vector<8x128xf32>
    %5 = vector.broadcast %1 : f32 to vector<8x128xf32>
    %6 = arith.addf %4, %5 : vector<8x128xf32>
    %c0_2 = arith.constant 0 : index
    %c0_3 = arith.constant 0 : index
    %7 = vector.load %arg3[%c0_2, %c0_3] : memref<8x128xf32, #tpu.memory_space<vmem>>, vector<8x128xf32>
    tpu.vector_store %arg3[%c0_2, %c0_3], %6 {strides = array<i32>} : memref<8x128xf32, #tpu.memory_space<vmem>>, vector<8x128xf32>,
    return
  }
  func.func @transform_0(%arg0: i32) -> i32 {
    %c0_i32 = arith.constant 0 : i32
    %c0_i32_0 = arith.constant 0 : i32
    return %c0_i32 : i32
  }
  func.func @transform_1(%arg0: i32) -> (i32, i32) {
    %c0_i32 = arith.constant 0 : i32
    %c0_i32_0 = arith.constant 0 : i32
    return %arg0, %c0_i32 : i32, i32
  }
  func.func @transform_2(%arg0: i32) -> (i32, i32) {
    %c0_i32 = arith.constant 0 : i32
    %c0_i32_0 = arith.constant 0 : i32
    return %arg0, %c0_i32 : i32, i32
  }
}

</mosaic_0001>

<llo_original>
// kernel: tpu_custom_call.1
$region0: #{tpu_custom_call.1}
  #allocation0 [shape = 'u32[]', space=smem, size = 0x4, offset = 0x4, fixed_abs, tag = 'smem constant byte address 0x4 - core index']
  #allocation1 [shape = 'u32[144,128]{1,0:T(1,128)}', space=vmem, size = 0x12000, scoped, tag = 'internal scratch']
  %s0 = inlined_call_operand.hbm [shape: f32[2], index: 0, kind: input, shape index: {}]
  %s1 = inlined_call_operand.hbm [shape: f32[8,128], index: 1, kind: input, shape index: {}]
  %s2 = inlined_call_operand.hbm [shape: f32[8,128], index: 2, kind: output, shape index: {}]
  %s3 = sld [smem:[#allocation0]]
  $region26: #{tpu_custom_call.1} parent=0
    _
  %s5 = ssub.s32 1, %s3
  %s6 = scalar_select 0, %s5, %s3
  $region1: #{tpu_custom_call.1} parent=0
    #allocation2 [shape = 'u8[512]{0}', space=smem, size = 0x200, scoped, tag = 'input window, operand 0, single buffered']
    #allocation3 [shape = 's32[1]{0}', space=sflag, size = 0x4, scoped, tag = 'scoped memory for tpu_custom_call.1']
    #allocation4 [shape = 's32[1]{0}', space=sflag, size = 0x4, scoped, tag = 'scoped memory for tpu_custom_call.1']
    #allocation5 [shape = 's32[1]{0}', space=sflag, size = 0x4, scoped, tag = 'scoped memory for tpu_custom_call.1']
    #allocation6 [shape = 'u8[4096]{0}', space=vmem, size = 0x1000, scoped, tag = 'input window, operand 1, single buffered']
    #allocation7 [shape = 'u8[4096]{0}', space=vmem, size = 0x1000, scoped, tag = 'output window, operand 0, single buffered']
    %7 = vsyncpa [#allocation5], 0
    %8 = vsyncpa [#allocation3], 0
    %9 = vsyncpa [#allocation4], 0
    // Predicated region
    $region2: #{tpu_custom_call.1} parent=1 // pred_check
      _
    $region3: #{tpu_custom_call.1} parent=1 // pred_check_branch
      %11 = sbr.rel (0) target = $region5
    $region4: #{tpu_custom_call.1} parent=1 // pred_region
      %s13 = ssub.s32 16, 16
      %14 = vsyncadd [#allocation5], %s13
      %17 = dma.hbm_to_smem %s0, 16, [#allocation2], [#allocation5]
    $region5: #{tpu_custom_call.1} parent=1 // pred_fallthru
      _
    // Predicated region
    $region6: #{tpu_custom_call.1} parent=1 // pred_check
      _
    $region7: #{tpu_custom_call.1} parent=1 // pred_check_branch
      %19 = sbr.rel (0) target = $region9
    $region8: #{tpu_custom_call.1} parent=1 // pred_region
      %s21 = ssub.s32 128, 128
      %22 = vsyncadd [#allocation3], %s21
      %s24 = sshll.u32 [#allocation6], 4
      %s25 = int_to_ptr.vmem [resolvable:$true] %s24
      %27 = dma.hbm_to_vmem [thread:$0]  %s1, 128, %s25, [#allocation3]
    $region9: #{tpu_custom_call.1} parent=1 // pred_fallthru
      _
    // Predicated region
    $region10: #{tpu_custom_call.1} parent=1 // pred_check
      _
    $region11: #{tpu_custom_call.1} parent=1 // pred_check_branch
      %29 = sbr.rel (0) target = $region13
    $region12: #{tpu_custom_call.1} parent=1 // pred_region
      %30 = dma.done [#allocation5], 16
    $region13: #{tpu_custom_call.1} parent=1 // pred_fallthru
      _
    // Predicated region
    $region14: #{tpu_custom_call.1} parent=1 // pred_check
      _
    $region15: #{tpu_custom_call.1} parent=1 // pred_check_branch
      %32 = sbr.rel (0) target = $region17
    $region16: #{tpu_custom_call.1} parent=1 // pred_region
      %33 = dma.done [#allocation3], 128
    $region17: #{tpu_custom_call.1} parent=1 // pred_fallthru
      _
    %34 = sfence
    %s35 = sld [smem:[#allocation2]]
    %s36 = sld [smem:[#allocation2 + $0x1]]
    %v37 = vld [vmem:[#allocation6] sm:$0xff]
    %v38 = vstv %s35
    %v39 = vmul.f32 %v37, %v38
    %v40 = vstv %s36
    %v41 = vadd.f32 %v39, %v40
    %42 = vst [vmem:[#allocation7] sm:$0xff] %v41
    // Predicated region
    $region18: #{tpu_custom_call.1} parent=1 // pred_check
      _
    $region19: #{tpu_custom_call.1} parent=1 // pred_check_branch
      %44 = sbr.rel (0) target = $region21
    $region20: #{tpu_custom_call.1} parent=1 // pred_region
      %s46 = ssub.s32 128, 128
      %47 = vsyncadd [#allocation4], %s46
      %s49 = sshll.u32 [#allocation7], 4
      %s50 = int_to_ptr.vmem [resolvable:$true] %s49
      %52 = dma.vmem_to_hbm [thread:$0]  %s50, 128, %s2, [#allocation4]
    $region21: #{tpu_custom_call.1} parent=1 // pred_fallthru
      _
    // Predicated region
    $region22: #{tpu_custom_call.1} parent=1 // pred_check
      _
    $region23: #{tpu_custom_call.1} parent=1 // pred_check_branch
      %54 = sbr.rel (0) target = $region25
    $region24: #{tpu_custom_call.1} parent=1 // pred_region
      %55 = dma.done [#allocation4], 128
    $region25: #{tpu_custom_call.1} parent=1 // pred_fallthru
      _
    %56 = vsyncpa [#allocation3], 1
    %57 = vsyncpa [#allocation4], 1
    %58 = vsyncpa [#allocation5], 1

</llo_original>
